<compile_context>
chip_gen: v7x
topology: tpu7x:2x2x1
jax: 0.10.0
libtpu: 0.0.40
codegen_flags: <defaults>
</compile_context>

<pallas_src>
import functools

import jax
import jax.numpy as jnp
from jax import lax
from jax.experimental import pallas as pl
from jax.experimental.pallas import tpu as pltpu

LN_EPS = 1e-5      # PyTorch nn.LayerNorm default
_LANE = 128
_SUBLANE = 8


def _round_up(x, m):
    return (x + m - 1) // m * m


def _gelu(h, approx):
    if approx:
        # tanh approximation -> EUP slot (off the VALU critical path).
        c = 0.7978845608028654  # sqrt(2/pi)
        return 0.5 * h * (1.0 + jnp.tanh(c * (h + 0.044715 * h * h * h)))
    # nn.GELU() default is the exact erf formulation.
    return 0.5 * h * (1.0 + lax.erf(h * (1.0 / jnp.sqrt(2.0))))


def _lane_mask(d_real, d_pad):
    """(1, d_pad) f32 mask selecting the first d_real lanes, or None if unpadded."""
    if d_real == d_pad:
        return None
    return (lax.broadcasted_iota(jnp.int32, (1, d_pad), 1) < d_real).astype(jnp.float32)


def _masked_layernorm(h, gamma, beta, d_real, mask):
    """LayerNorm over the first `d_real` (lane-padded) features.

    Padded input columns are exactly 0 by construction; the mask keeps the
    mean/variance identical to the unpadded computation, and zero-padded
    gamma/beta keep padded output columns exactly 0.
    """
    if mask is None:
        mean = jnp.mean(h, axis=-1, keepdims=True)
        diff = h - mean
        var = jnp.mean(diff * diff, axis=-1, keepdims=True)
    else:
        inv_d = 1.0 / d_real
        mean = jnp.sum(h * mask, axis=-1, keepdims=True) * inv_d
        diff = (h - mean) * mask
        var = jnp.sum(diff * diff, axis=-1, keepdims=True) * inv_d
    return diff * lax.rsqrt(var + LN_EPS) * gamma + beta


def _fused_autoencoder_kernel(
        x_ref,
        ew1_ref, ew2_ref, dw1_ref, dw2_ref,
        ph_ref, pt_ref, pd_ref,
        *out_refs,
        real_dims, pad_dims, write_encoded, gelu_approx):
    """Encoder + decoder fused: 4 matmuls, 4 LayerNorms, 2 GELUs per row tile."""
    d_in, hid, tgt = real_dims
    d_in_p, hid_p, tgt_p = pad_dims

    if write_encoded:
        enc_ref, dec_ref = out_refs
    else:
        (dec_ref,) = out_refs

    # Hoisted lane masks (hid mask shared by both hidden-layer LayerNorms).
    mask_hid = _lane_mask(hid, hid_p)
    mask_tgt = _lane_mask(tgt, tgt_p)
    mask_din = _lane_mask(d_in, d_in_p)

    # Packed per-feature parameters (rows of (8, C) f32 slabs).
    ph = ph_ref[...]            # hid_p : eb1, eg1, ebe1, db1, dg1, dbe1
    pt = pt_ref[...]            # tgt_p : eb2, eg2, ebe2
    pd = pd_ref[...]            # d_in_p: db2, dg2, dbe2
    eb1, eg1, ebe1 = ph[0:1], ph[1:2], ph[2:3]
    db1, dg1, dbe1 = ph[3:4], ph[4:5], ph[5:6]
    eb2, eg2, ebe2 = pt[0:1], pt[1:2], pt[2:3]
    db2, dg2, dbe2 = pd[0:1], pd[1:2], pd[2:3]

    def mm(a, w_ref):
        w = w_ref[...]
        if a.dtype != w.dtype:          # bf16 MXU operands when weights are bf16
            a = a.astype(w.dtype)
        return jnp.dot(a, w, preferred_element_type=jnp.float32)

    x = x_ref[...].astype(jnp.float32)

    # ---- encoder: Linear -> LN -> GELU -> (Dropout = identity, eval) -> Linear -> LN
    h = mm(x, ew1_ref) + eb1
    h = _masked_layernorm(h, eg1, ebe1, hid, mask_hid)
    h = _gelu(h, gelu_approx)
    e = mm(h, ew2_ref) + eb2
    e = _masked_layernorm(e, eg2, ebe2, tgt, mask_tgt)
    if write_encoded:
        enc_ref[...] = e.astype(enc_ref.dtype)

    # ---- decoder: consumes `e` straight from registers (no HBM round trip)
    h = mm(e, dw1_ref) + db1
    h = _masked_layernorm(h, dg1, dbe1, hid, mask_hid)
    h = _gelu(h, gelu_approx)
    y = mm(h, dw2_ref) + db2
    y = _masked_layernorm(y, dg2, dbe2, d_in, mask_din)
    dec_ref[...] = y.astype(dec_ref.dtype)


def _choose_tm(n_rows, max_tm):
    """Large row tile, targeting >= 4 grid steps (>= 2 per v7x core)."""
    target = -(-n_rows // 4)                              # ceil(n / 4)
    align = _LANE if n_rows >= 2 * _LANE else _SUBLANE
    tm = _round_up(max(1, target), align)
    return max(_SUBLANE, min(max_tm, tm))


def _vmem_capacity_bytes():
    try:
        info = pltpu.get_tpu_info()
        cap = getattr(info, "vmem_capacity_bytes", None)
        if cap:
            return int(cap)
    except Exception:
        pass
    return 64 * 1024 * 1024        # v7x-safe fallback


def _pad_mat(w, rows, cols, dtype):
    return jnp.pad(w, ((0, rows - w.shape[0]), (0, cols - w.shape[1]))).astype(dtype)


def _pack_params(rows, width):
    """Stack 1-D param vectors into an (8, width) f32 slab (zero padded)."""
    arr = jnp.stack([jnp.pad(r, (0, width - r.shape[0])) for r in rows])
    if arr.shape[0] < _SUBLANE:
        arr = jnp.pad(arr, ((0, _SUBLANE - arr.shape[0]), (0, 0)))
    return arr.astype(jnp.float32)


def autoencoder_forward(x, enc, dec, *, return_encoded=False, max_tm=512,
                        matmul_dtype=jnp.bfloat16, gelu_approx=False):
    """x: (batch, seq, input_dim) float32. Returns decoded (and encoded)."""
    b, s, d_in = x.shape
    n = b * s
    hid = enc["w1"].shape[1]
    tgt = enc["w2"].shape[1]

    # Lane-dense (multiple-of-128) feature widths.
    d_in_p = _round_up(d_in, _LANE)
    hid_p = _round_up(hid, _LANE)
    tgt_p = _round_up(tgt, _LANE)

    w_dtype = jnp.float32 if matmul_dtype is None else matmul_dtype
    w_item = jnp.dtype(w_dtype).itemsize
    f32 = 4

    # ---- VMEM budget (generation aware) -------------------------------------
    n_weight_elems = d_in_p * hid_p + hid_p * tgt_p + tgt_p * hid_p + hid_p * d_in_p
    w_bytes = n_weight_elems * w_item                   # single-buffered
    p_bytes = _SUBLANE * (hid_p + tgt_p + d_in_p) * f32 # single-buffered
    maxdim = max(d_in_p, hid_p, tgt_p)

    def footprint(t):
        io = t * (d_in_p + d_in_p + (tgt_p if return_encoded else 0)) * f32
        inter = 6 * t * maxdim * f32                    # live f32 intermediates
        return 2 * io + w_bytes + p_bytes + inter       # io double-buffered

    cap = _vmem_capacity_bytes()
    budget = int(0.70 * cap)
    limit_cap = int(0.85 * cap)                         # headroom below physical

    tm = _choose_tm(n, max_tm)
    while tm > _SUBLANE and footprint(tm) > budget:
        tm = max(_SUBLANE, _round_up(tm // 2, _SUBLANE))
    if footprint(tm) > budget:
        # TODO(synk): tile the weight output-feature columns (inner
        # pltpu.emit_pipeline) or split encoder/decoder into two pallas_calls
        # when the weights alone exceed the VMEM budget (tm-independent).
        raise ValueError("weights too large for the fully-fused VMEM-resident kernel")

    vmem_limit = int(min(limit_cap, max(24 * 1024 * 1024,
                                        footprint(tm) + 4 * 1024 * 1024)))

    # ---- pad rows (to tm multiple) and features (to 128 multiples) ----------
    n_pad = _round_up(n, tm)
    x2d = jnp.pad(x.reshape(n, d_in), ((0, n_pad - n), (0, d_in_p - d_in)))

    ew1 = _pad_mat(enc["w1"], d_in_p, hid_p, w_dtype)
    ew2 = _pad_mat(enc["w2"], hid_p, tgt_p, w_dtype)
    dw1 = _pad_mat(dec["w1"], tgt_p, hid_p, w_dtype)
    dw2 = _pad_mat(dec["w2"], hid_p, d_in_p, w_dtype)
    # LN gammas/betas are zero-padded so padded lanes stay exactly zero.
    p_hid = _pack_params([enc["b1"], enc["g1"], enc["be1"],
                          dec["b1"], dec["g1"], dec["be1"]], hid_p)
    p_tgt = _pack_params([enc["b2"], enc["g2"], enc["be2"]], tgt_p)
    p_din = _pack_params([dec["b2"], dec["g2"], dec["be2"]], d_in_p)

    grid = (n_pad // tm,)
    rep = lambda i: (0, 0)                 # constant index -> DMA'd once

    def wspec(r, c):
        # Single-buffer: constant index_map means double buffering only wastes VMEM.
        return pl.BlockSpec((r, c), rep, pipeline_mode=pl.Buffered(1))

    in_specs = [
        pl.BlockSpec((tm, d_in_p), lambda i: (i, 0)),
        wspec(d_in_p, hid_p), wspec(hid_p, tgt_p),
        wspec(tgt_p, hid_p), wspec(hid_p, d_in_p),
        wspec(_SUBLANE, hid_p), wspec(_SUBLANE, tgt_p), wspec(_SUBLANE, d_in_p),
    ]

    if return_encoded:
        out_shape = (jax.ShapeDtypeStruct((n_pad, tgt_p), x.dtype),
                     jax.ShapeDtypeStruct((n_pad, d_in_p), x.dtype))
        out_specs = [pl.BlockSpec((tm, tgt_p), lambda i: (i, 0)),
                     pl.BlockSpec((tm, d_in_p), lambda i: (i, 0))]
    else:
        out_shape = jax.ShapeDtypeStruct((n_pad, d_in_p), x.dtype)
        out_specs = pl.BlockSpec((tm, d_in_p), lambda i: (i, 0))

    kernel = functools.partial(
        _fused_autoencoder_kernel,
        real_dims=(d_in, hid, tgt),
        pad_dims=(d_in_p, hid_p, tgt_p),
        write_encoded=return_encoded,
        gelu_approx=gelu_approx)

    # Advisory cost estimate (padded arithmetic, actual operand widths).
    flops = 2 * n_pad * n_weight_elems
    transcendentals = 2 * n_pad * hid_p
    bytes_accessed = (f32 * n_pad * (d_in_p + d_in_p + (tgt_p if return_encoded else 0))
                      + w_item * n_weight_elems + p_bytes)
    cost = pl.CostEstimate(flops=int(flops),
                           transcendentals=int(transcendentals),
                           bytes_accessed=int(bytes_accessed))

    result = pl.pallas_call(
        kernel,
        out_shape=out_shape,
        grid_spec=pltpu.PrefetchScalarGridSpec(
            num_scalar_prefetch=0,
            grid=grid,
            in_specs=in_specs,
            out_specs=out_specs,
        ),
        compiler_params=pltpu.CompilerParams(
            dimension_semantics=("parallel",),
            vmem_limit_bytes=vmem_limit),
        cost_estimate=cost,
    )(x2d, ew1, ew2, dw1, dw2, p_hid, p_tgt, p_din)

    if return_encoded:
        encoded_p, decoded_p = result
        encoded = encoded_p[:n, :tgt].reshape(b, s, tgt)
        decoded = decoded_p[:n, :d_in].reshape(b, s, d_in)
        return encoded, decoded
    decoded = result[:n, :d_in].reshape(b, s, d_in)
    return decoded


def init_params(key, input_dim, target_dim, hidden_factor=2):
    """Matches _init_weights: Linear w ~ N(0, 0.02), b=0; LayerNorm w=1, b=0."""
    hid = target_dim * hidden_factor
    keys = jax.random.split(key, 4)

    def lin(k, din, dout):
        # PyTorch Linear stores weight as (dout, din); we keep (din, dout) for x @ W.
        w = 0.02 * jax.random.normal(k, (din, dout), dtype=jnp.float32)
        b = jnp.zeros((dout,), jnp.float32)
        return w, b

    def ln(d):
        return jnp.ones((d,), jnp.float32), jnp.zeros((d,), jnp.float32)

    enc = {}
    enc["w1"], enc["b1"] = lin(keys[0], input_dim, hid)
    enc["g1"], enc["be1"] = ln(hid)
    enc["w2"], enc["b2"] = lin(keys[1], hid, target_dim)
    enc["g2"], enc["be2"] = ln(target_dim)

    dec = {}
    dec["w1"], dec["b1"] = lin(keys[2], target_dim, hid)
    dec["g1"], dec["be1"] = ln(hid)
    dec["w2"], dec["b2"] = lin(keys[3], hid, input_dim)
    dec["g2"], dec["be2"] = ln(input_dim)

    return enc, dec


# ----------------------------- reference (plain JAX) -----------------------------
def _ref_layernorm(h, gamma, beta):
    mean = jnp.mean(h, axis=-1, keepdims=True)
    var = jnp.mean((h - mean) ** 2, axis=-1, keepdims=True)
    return (h - mean) * lax.rsqrt(var + LN_EPS) * gamma + beta


def _reference_block(x2d, w1, b1, g1, be1, w2, b2, g2, be2, matmul_dtype=None):
    def mm(a, w):
        if matmul_dtype is not None:
            a = a.astype(matmul_dtype)
            w = w.astype(matmul_dtype)
        return jnp.dot(a, w, preferred_element_type=jnp.float32)

    h = mm(x2d, w1) + b1
    h = _ref_layernorm(h, g1, be1)
    h = _gelu(h, approx=False)
    y = mm(h, w2) + b2
    return _ref_layernorm(y, g2, be2)


def _reference_forward(x2d, enc, dec, matmul_dtype=None):
    e = _reference_block(x2d, enc["w1"], enc["b1"], enc["g1"], enc["be1"],
                         enc["w2"], enc["b2"], enc["g2"], enc["be2"], matmul_dtype)
    d = _reference_block(e, dec["w1"], dec["b1"], dec["g1"], dec["be1"],
                         dec["w2"], dec["b2"], dec["g2"], dec["be2"], matmul_dtype)
    return e, d


if __name__ == "__main__":
    batch, seq, input_dim, target_dim = 2, 8, 32, 16
    hidden_factor = 2

    key = jax.random.PRNGKey(0)
    kx, kp = jax.random.split(key)
    x = jax.random.normal(kx, (batch, seq, input_dim), dtype=jnp.float32)
    enc, dec = init_params(kp, input_dim, target_dim, hidden_factor)
    x2d = x.reshape(-1, input_dim)

    # ---- exact f32 path: must match the f32 reference tightly ----
    fwd_f32 = jax.jit(functools.partial(autoencoder_forward,
                                        return_encoded=True, matmul_dtype=None))
    enc_f32, dec_f32 = fwd_f32(x, enc, dec)
    jax.block_until_ready(dec_f32)
    ref_e32, ref_d32 = _reference_forward(x2d, enc, dec, matmul_dtype=None)
    assert enc_f32.shape == (batch, seq, target_dim)
    assert dec_f32.shape == (batch, seq, input_dim)
    assert jnp.allclose(enc_f32.reshape(-1, target_dim), ref_e32, atol=1e-4)
    assert jnp.allclose(dec_f32.reshape(-1, input_dim), ref_d32, atol=1e-4)

    # ---- default bf16-MXU path: compared against a bf16-operand reference ----
    fwd_bf16 = jax.jit(functools.partial(autoencoder_forward, return_encoded=True))
    enc_bf, dec_bf = fwd_bf16(x, enc, dec)
    jax.block_until_ready(dec_bf)
    ref_eb, ref_db = _reference_forward(x2d, enc, dec, matmul_dtype=jnp.bfloat16)
    assert jnp.allclose(enc_bf.reshape(-1, target_dim), ref_eb, atol=2e-2, rtol=2e-2)
    assert jnp.allclose(dec_bf.reshape(-1, input_dim), ref_db, atol=2e-2, rtol=2e-2)

    # ---- decoded-only variant (drops encoded output / writeback entirely) ----
    dec_only = jax.jit(autoencoder_forward)(x, enc, dec)
    jax.block_until_ready(dec_only)
    assert dec_only.shape == (batch, seq, input_dim)
    assert jnp.allclose(dec_only, dec_bf, atol=1e-6)

    print("KERNEL_OK")
</pallas_src>

<mosaic_0001>
module attributes {stable_mosaic.version = 11 : i64} {
  func.func @_fused_autoencoder_kernel(%arg0: i32, %arg1: memref<8x128xf32, #tpu.memory_space<vmem>>, %arg2: memref<128x128xf32, #tpu.memory_space<vmem>>, %arg3: memref<128x128xf32, #tpu.memory_space<vmem>>, %arg4: memref<128x128xf32, #tpu.memory_space<vmem>>, %arg5: memref<128x128xf32, #tpu.memory_space<vmem>>, %arg6: memref<8x128xf32, #tpu.memory_space<vmem>>, %arg7: memref<8x128xf32, #tpu.memory_space<vmem>>, %arg8: memref<8x128xf32, #tpu.memory_space<vmem>>, %arg9: memref<8x128xf32, #tpu.memory_space<vmem>>, %arg10: memref<8x128xf32, #tpu.memory_space<vmem>>) attributes {dimension_semantics = [#tpu.dimension_semantics<parallel>], iteration_bounds = array<i64: 2>, scalar_prefetch = 0 : i64, scratch_operands = 0 : i64, tpu.core_type = #tpu.core_type<tc>, window_params = [{transform_indices = @transform_0, window_bounds = array<i64: 8, 128>}, {pipeline_mode = #tpu.pipeline_mode<synchronous>, transform_indices = @transform_1, window_bounds = array<i64: 128, 128>}, {pipeline_mode = #tpu.pipeline_mode<synchronous>, transform_indices = @transform_2, window_bounds = array<i64: 128, 128>}, {pipeline_mode = #tpu.pipeline_mode<synchronous>, transform_indices = @transform_3, window_bounds = array<i64: 128, 128>}, {pipeline_mode = #tpu.pipeline_mode<synchronous>, transform_indices = @transform_4, window_bounds = array<i64: 128, 128>}, {pipeline_mode = #tpu.pipeline_mode<synchronous>, transform_indices = @transform_5, window_bounds = array<i64: 8, 128>}, {pipeline_mode = #tpu.pipeline_mode<synchronous>, transform_indices = @transform_6, window_bounds = array<i64: 8, 128>}, {pipeline_mode = #tpu.pipeline_mode<synchronous>, transform_indices = @transform_7, window_bounds = array<i64: 8, 128>}, {transform_indices = @transform_8, window_bounds = array<i64: 8, 128>}, {transform_indices = @transform_9, window_bounds = array<i64: 8, 128>}]} {
    %0 = tpu.iota {dimensions = array<i32: 1>} : vector<1x128xi32>
    %c32_i32 = arith.constant 32 : i32
    %1 = vector.broadcast %c32_i32 : i32 to vector<1x128xi32>
    %2 = arith.cmpi slt, %0, %1 : vector<1x128xi32>
    %3 = arith.extui %2 : vector<1x128xi1> to vector<1x128xi32>
    %4 = arith.sitofp %3 : vector<1x128xi32> to vector<1x128xf32>
    %5 = tpu.iota {dimensions = array<i32: 1>} : vector<1x128xi32>
    %c16_i32 = arith.constant 16 : i32
    %6 = vector.broadcast %c16_i32 : i32 to vector<1x128xi32>
    %7 = arith.cmpi slt, %5, %6 : vector<1x128xi32>
    %8 = arith.extui %7 : vector<1x128xi1> to vector<1x128xi32>
    %9 = arith.sitofp %8 : vector<1x128xi32> to vector<1x128xf32>
    %10 = tpu.iota {dimensions = array<i32: 1>} : vector<1x128xi32>
    %c32_i32_0 = arith.constant 32 : i32
    %11 = vector.broadcast %c32_i32_0 : i32 to vector<1x128xi32>
    %12 = arith.cmpi slt, %10, %11 : vector<1x128xi32>
    %13 = arith.extui %12 : vector<1x128xi1> to vector<1x128xi32>
    %14 = arith.sitofp %13 : vector<1x128xi32> to vector<1x128xf32>
    %c0 = arith.constant 0 : index
    %c0_1 = arith.constant 0 : index
    %15 = vector.load %arg6[%c0, %c0_1] : memref<8x128xf32, #tpu.memory_space<vmem>>, vector<8x128xf32>
    %c0_2 = arith.constant 0 : index
    %c0_3 = arith.constant 0 : index
    %16 = vector.load %arg7[%c0_2, %c0_3] : memref<8x128xf32, #tpu.memory_space<vmem>>, vector<8x128xf32>
    %c0_4 = arith.constant 0 : index
    %c0_5 = arith.constant 0 : index
    %17 = vector.load %arg8[%c0_4, %c0_5] : memref<8x128xf32, #tpu.memory_space<vmem>>, vector<8x128xf32>
    %18 = vector.extract_strided_slice %15 {offsets = [0, 0], sizes = [1, 128], strides = [1, 1]} : vector<8x128xf32> to vector<1x128xf32>
    %19 = vector.extract_strided_slice %15 {offsets = [1, 0], sizes = [1, 128], strides = [1, 1]} : vector<8x128xf32> to vector<1x128xf32>
    %20 = vector.extract_strided_slice %15 {offsets = [2, 0], sizes = [1, 128], strides = [1, 1]} : vector<8x128xf32> to vector<1x128xf32>
    %21 = vector.extract_strided_slice %15 {offsets = [3, 0], sizes = [1, 128], strides = [1, 1]} : vector<8x128xf32> to vector<1x128xf32>
    %22 = vector.extract_strided_slice %15 {offsets = [4, 0], sizes = [1, 128], strides = [1, 1]} : vector<8x128xf32> to vector<1x128xf32>
    %23 = vector.extract_strided_slice %15 {offsets = [5, 0], sizes = [1, 128], strides = [1, 1]} : vector<8x128xf32> to vector<1x128xf32>
    %24 = vector.extract_strided_slice %16 {offsets = [0, 0], sizes = [1, 128], strides = [1, 1]} : vector<8x128xf32> to vector<1x128xf32>
    %25 = vector.extract_strided_slice %16 {offsets = [1, 0], sizes = [1, 128], strides = [1, 1]} : vector<8x128xf32> to vector<1x128xf32>
    %26 = vector.extract_strided_slice %16 {offsets = [2, 0], sizes = [1, 128], strides = [1, 1]} : vector<8x128xf32> to vector<1x128xf32>
    %27 = vector.extract_strided_slice %17 {offsets = [0, 0], sizes = [1, 128], strides = [1, 1]} : vector<8x128xf32> to vector<1x128xf32>
    %28 = vector.extract_strided_slice %17 {offsets = [1, 0], sizes = [1, 128], strides = [1, 1]} : vector<8x128xf32> to vector<1x128xf32>
    %29 = vector.extract_strided_slice %17 {offsets = [2, 0], sizes = [1, 128], strides = [1, 1]} : vector<8x128xf32> to vector<1x128xf32>
    %c0_6 = arith.constant 0 : index
    %c0_7 = arith.constant 0 : index
    %30 = vector.load %arg1[%c0_6, %c0_7] : memref<8x128xf32, #tpu.memory_space<vmem>>, vector<8x128xf32>
    %c0_8 = arith.constant 0 : index
    %c0_9 = arith.constant 0 : index
    %31 = vector.load %arg2[%c0_8, %c0_9] : memref<128x128xf32, #tpu.memory_space<vmem>>, vector<128x128xf32>
    %cst = arith.constant dense<0.000000e+00> : vector<8x128xf32>
    %32 = tpu.matmul %30, %31, %cst {dimension_numbers = #tpu.dot_dimension_numbers<[1], [0], [0], [1], [0, 0, 1, 1], [], []>} : vector<8x128xf32>, vector<128x128xf32>, vector<8x128xf32> -> vector<8x128xf32>
    %33 = vector.broadcast %18 : vector<1x128xf32> to vector<8x128xf32>
    %34 = arith.addf %32, %33 : vector<8x128xf32>
    %35 = vector.broadcast %4 : vector<1x128xf32> to vector<8x128xf32>
    %36 = arith.mulf %34, %35 : vector<8x128xf32>
    %cst_10 = arith.constant dense<0.000000e+00> : vector<8xf32>
    %37 = vector.multi_reduction <add>, %36, %cst_10 [1] : vector<8x128xf32> to vector<8xf32>
    %38 = vector.shape_cast %37 : vector<8xf32> to vector<8x1xf32>
    %cst_11 = arith.constant 3.125000e-02 : f32
    %39 = vector.broadcast %cst_11 : f32 to vector<8x1xf32>
    %40 = arith.mulf %38, %39 : vector<8x1xf32>
    %41 = vector.broadcast %40 : vector<8x1xf32> to vector<8x128xf32>
    %42 = arith.subf %34, %41 : vector<8x128xf32>
    %43 = vector.broadcast %4 : vector<1x128xf32> to vector<8x128xf32>
    %44 = arith.mulf %42, %43 : vector<8x128xf32>
    %45 = arith.mulf %44, %44 : vector<8x128xf32>
    %cst_12 = arith.constant dense<0.000000e+00> : vector<8xf32>
    %46 = vector.multi_reduction <add>, %45, %cst_12 [1] : vector<8x128xf32> to vector<8xf32>
    %47 = vector.shape_cast %46 : vector<8xf32> to vector<8x1xf32>
    %cst_13 = arith.constant 3.125000e-02 : f32
    %48 = vector.broadcast %cst_13 : f32 to vector<8x1xf32>
    %49 = arith.mulf %47, %48 : vector<8x1xf32>
    %cst_14 = arith.constant 9.99999974E-6 : f32
    %50 = vector.broadcast %cst_14 : f32 to vector<8x1xf32>
    %51 = arith.addf %49, %50 : vector<8x1xf32>
    %52 = math.rsqrt %51 : vector<8x1xf32>
    %53 = vector.broadcast %52 : vector<8x1xf32> to vector<8x128xf32>
    %54 = arith.mulf %44, %53 : vector<8x128xf32>
    %55 = vector.broadcast %19 : vector<1x128xf32> to vector<8x128xf32>
    %56 = arith.mulf %54, %55 : vector<8x128xf32>
    %57 = vector.broadcast %20 : vector<1x128xf32> to vector<8x128xf32>
    %58 = arith.addf %56, %57 : vector<8x128xf32>
    %cst_15 = arith.constant 5.000000e-01 : f32
    %59 = vector.broadcast %cst_15 : f32 to vector<8x128xf32>
    %60 = arith.mulf %59, %58 : vector<8x128xf32>
    %cst_16 = arith.constant 2.000000e+00 : f32
    %61 = math.sqrt %cst_16 : f32
    %cst_17 = arith.constant 1.000000e+00 : f32
    %62 = arith.divf %cst_17, %61 : f32
    %63 = vector.broadcast %62 : f32 to vector<8x128xf32>
    %64 = arith.mulf %58, %63 : vector<8x128xf32>
    %65 = math.erf %64 : vector<8x128xf32>
    %cst_18 = arith.constant 1.000000e+00 : f32
    %66 = vector.broadcast %cst_18 : f32 to vector<8x128xf32>
    %67 = arith.addf %66, %65 : vector<8x128xf32>
    %68 = arith.mulf %60, %67 : vector<8x128xf32>
    %c0_19 = arith.constant 0 : index
    %c0_20 = arith.constant 0 : index
    %69 = vector.load %arg3[%c0_19, %c0_20] : memref<128x128xf32, #tpu.memory_space<vmem>>, vector<128x128xf32>
    %cst_21 = arith.constant dense<0.000000e+00> : vector<8x128xf32>
    %70 = tpu.matmul %68, %69, %cst_21 {dimension_numbers = #tpu.dot_dimension_numbers<[1], [0], [0], [1], [0, 0, 1, 1], [], []>} : vector<8x128xf32>, vector<128x128xf32>, vector<8x128xf32> -> vector<8x128xf32>
    %71 = vector.broadcast %24 : vector<1x128xf32> to vector<8x128xf32>
    %72 = arith.addf %70, %71 : vector<8x128xf32>
    %73 = vector.broadcast %9 : vector<1x128xf32> to vector<8x128xf32>
    %74 = arith.mulf %72, %73 : vector<8x128xf32>
    %cst_22 = arith.constant dense<0.000000e+00> : vector<8xf32>
    %75 = vector.multi_reduction <add>, %74, %cst_22 [1] : vector<8x128xf32> to vector<8xf32>
    %76 = vector.shape_cast %75 : vector<8xf32> to vector<8x1xf32>
    %cst_23 = arith.constant 6.250000e-02 : f32
    %77 = vector.broadcast %cst_23 : f32 to vector<8x1xf32>
    %78 = arith.mulf %76, %77 : vector<8x1xf32>
    %79 = vector.broadcast %78 : vector<8x1xf32> to vector<8x128xf32>
    %80 = arith.subf %72, %79 : vector<8x128xf32>
    %81 = vector.broadcast %9 : vector<1x128xf32> to vector<8x128xf32>
    %82 = arith.mulf %80, %81 : vector<8x128xf32>
    %83 = arith.mulf %82, %82 : vector<8x128xf32>
    %cst_24 = arith.constant dense<0.000000e+00> : vector<8xf32>
    %84 = vector.multi_reduction <add>, %83, %cst_24 [1] : vector<8x128xf32> to vector<8xf32>
    %85 = vector.shape_cast %84 : vector<8xf32> to vector<8x1xf32>
    %cst_25 = arith.constant 6.250000e-02 : f32
    %86 = vector.broadcast %cst_25 : f32 to vector<8x1xf32>
    %87 = arith.mulf %85, %86 : vector<8x1xf32>
    %cst_26 = arith.constant 9.99999974E-6 : f32
    %88 = vector.broadcast %cst_26 : f32 to vector<8x1xf32>
    %89 = arith.addf %87, %88 : vector<8x1xf32>
    %90 = math.rsqrt %89 : vector<8x1xf32>
    %91 = vector.broadcast %90 : vector<8x1xf32> to vector<8x128xf32>
    %92 = arith.mulf %82, %91 : vector<8x128xf32>
    %93 = vector.broadcast %25 : vector<1x128xf32> to vector<8x128xf32>
    %94 = arith.mulf %92, %93 : vector<8x128xf32>
    %95 = vector.broadcast %26 : vector<1x128xf32> to vector<8x128xf32>
    %96 = arith.addf %94, %95 : vector<8x128xf32>
    %c0_27 = arith.constant 0 : index
    %c0_28 = arith.constant 0 : index
    %97 = vector.load %arg9[%c0_27, %c0_28] : memref<8x128xf32, #tpu.memory_space<vmem>>, vector<8x128xf32>
    tpu.vector_store %arg9[%c0_27, %c0_28], %96 {strides = array<i32>} : memref<8x128xf32, #tpu.memory_space<vmem>>, vector<8x128xf32>,
    %c0_29 = arith.constant 0 : index
    %c0_30 = arith.constant 0 : index
    %98 = vector.load %arg4[%c0_29, %c0_30] : memref<128x128xf32, #tpu.memory_space<vmem>>, vector<128x128xf32>
    %cst_31 = arith.constant dense<0.000000e+00> : vector<8x128xf32>
    %99 = tpu.matmul %96, %98, %cst_31 {dimension_numbers = #tpu.dot_dimension_numbers<[1], [0], [0], [1], [0, 0, 1, 1], [], []>} : vector<8x128xf32>, vector<128x128xf32>, vector<8x128xf32> -> vector<8x128xf32>
    %100 = vector.broadcast %21 : vector<1x128xf32> to vector<8x128xf32>
    %101 = arith.addf %99, %100 : vector<8x128xf32>
    %102 = vector.broadcast %4 : vector<1x128xf32> to vector<8x128xf32>
    %103 = arith.mulf %101, %102 : vector<8x128xf32>
    %cst_32 = arith.constant dense<0.000000e+00> : vector<8xf32>
    %104 = vector.multi_reduction <add>, %103, %cst_32 [1] : vector<8x128xf32> to vector<8xf32>
    %105 = vector.shape_cast %104 : vector<8xf32> to vector<8x1xf32>
    %cst_33 = arith.constant 3.125000e-02 : f32
    %106 = vector.broadcast %cst_33 : f32 to vector<8x1xf32>
    %107 = arith.mulf %105, %106 : vector<8x1xf32>
    %108 = vector.broadcast %107 : vector<8x1xf32> to vector<8x128xf32>
    %109 = arith.subf %101, %108 : vector<8x128xf32>
    %110 = vector.broadcast %4 : vector<1x128xf32> to vector<8x128xf32>
    %111 = arith.mulf %109, %110 : vector<8x128xf32>
    %112 = arith.mulf %111, %111 : vector<8x128xf32>
    %cst_34 = arith.constant dense<0.000000e+00> : vector<8xf32>
    %113 = vector.multi_reduction <add>, %112, %cst_34 [1] : vector<8x128xf32> to vector<8xf32>
    %114 = vector.shape_cast %113 : vector<8xf32> to vector<8x1xf32>
    %cst_35 = arith.constant 3.125000e-02 : f32
    %115 = vector.broadcast %cst_35 : f32 to vector<8x1xf32>
    %116 = arith.mulf %114, %115 : vector<8x1xf32>
    %cst_36 = arith.constant 9.99999974E-6 : f32
    %117 = vector.broadcast %cst_36 : f32 to vector<8x1xf32>
    %118 = arith.addf %116, %117 : vector<8x1xf32>
    %119 = math.rsqrt %118 : vector<8x1xf32>
    %120 = vector.broadcast %119 : vector<8x1xf32> to vector<8x128xf32>
    %121 = arith.mulf %111, %120 : vector<8x128xf32>
    %122 = vector.broadcast %22 : vector<1x128xf32> to vector<8x128xf32>
    %123 = arith.mulf %121, %122 : vector<8x128xf32>
    %124 = vector.broadcast %23 : vector<1x128xf32> to vector<8x128xf32>
    %125 = arith.addf %123, %124 : vector<8x128xf32>
    %cst_37 = arith.constant 5.000000e-01 : f32
    %126 = vector.broadcast %cst_37 : f32 to vector<8x128xf32>
    %127 = arith.mulf %126, %125 : vector<8x128xf32>
    %cst_38 = arith.constant 2.000000e+00 : f32
    %128 = math.sqrt %cst_38 : f32
    %cst_39 = arith.constant 1.000000e+00 : f32
    %129 = arith.divf %cst_39, %128 : f32
    %130 = vector.broadcast %129 : f32 to vector<8x128xf32>
    %131 = arith.mulf %125, %130 : vector<8x128xf32>
    %132 = math.erf %131 : vector<8x128xf32>
    %cst_40 = arith.constant 1.000000e+00 : f32
    %133 = vector.broadcast %cst_40 : f32 to vector<8x128xf32>
    %134 = arith.addf %133, %132 : vector<8x128xf32>
    %135 = arith.mulf %127, %134 : vector<8x128xf32>
    %c0_41 = arith.constant 0 : index
    %c0_42 = arith.constant 0 : index
    %136 = vector.load %arg5[%c0_41, %c0_42] : memref<128x128xf32, #tpu.memory_space<vmem>>, vector<128x128xf32>
    %cst_43 = arith.constant dense<0.000000e+00> : vector<8x128xf32>
    %137 = tpu.matmul %135, %136, %cst_43 {dimension_numbers = #tpu.dot_dimension_numbers<[1], [0], [0], [1], [0, 0, 1, 1], [], []>} : vector<8x128xf32>, vector<128x128xf32>, vector<8x128xf32> -> vector<8x128xf32>
    %138 = vector.broadcast %27 : vector<1x128xf32> to vector<8x128xf32>
    %139 = arith.addf %137, %138 : vector<8x128xf32>
    %140 = vector.broadcast %14 : vector<1x128xf32> to vector<8x128xf32>
    %141 = arith.mulf %139, %140 : vector<8x128xf32>
    %cst_44 = arith.constant dense<0.000000e+00> : vector<8xf32>
    %142 = vector.multi_reduction <add>, %141, %cst_44 [1] : vector<8x128xf32> to vector<8xf32>
    %143 = vector.shape_cast %142 : vector<8xf32> to vector<8x1xf32>
    %cst_45 = arith.constant 3.125000e-02 : f32
    %144 = vector.broadcast %cst_45 : f32 to vector<8x1xf32>
    %145 = arith.mulf %143, %144 : vector<8x1xf32>
    %146 = vector.broadcast %145 : vector<8x1xf32> to vector<8x128xf32>
    %147 = arith.subf %139, %146 : vector<8x128xf32>
    %148 = vector.broadcast %14 : vector<1x128xf32> to vector<8x128xf32>
    %149 = arith.mulf %147, %148 : vector<8x128xf32>
    %150 = arith.mulf %149, %149 : vector<8x128xf32>
    %cst_46 = arith.constant dense<0.000000e+00> : vector<8xf32>
    %151 = vector.multi_reduction <add>, %150, %cst_46 [1] : vector<8x128xf32> to vector<8xf32>
    %152 = vector.shape_cast %151 : vector<8xf32> to vector<8x1xf32>
    %cst_47 = arith.constant 3.125000e-02 : f32
    %153 = vector.broadcast %cst_47 : f32 to vector<8x1xf32>
    %154 = arith.mulf %152, %153 : vector<8x1xf32>
    %cst_48 = arith.constant 9.99999974E-6 : f32
    %155 = vector.broadcast %cst_48 : f32 to vector<8x1xf32>
    %156 = arith.addf %154, %155 : vector<8x1xf32>
    %157 = math.rsqrt %156 : vector<8x1xf32>
    %158 = vector.broadcast %157 : vector<8x1xf32> to vector<8x128xf32>
    %159 = arith.mulf %149, %158 : vector<8x128xf32>
    %160 = vector.broadcast %28 : vector<1x128xf32> to vector<8x128xf32>
    %161 = arith.mulf %159, %160 : vector<8x128xf32>
    %162 = vector.broadcast %29 : vector<1x128xf32> to vector<8x128xf32>
    %163 = arith.addf %161, %162 : vector<8x128xf32>
    %c0_49 = arith.constant 0 : index
    %c0_50 = arith.constant 0 : index
    %164 = vector.load %arg10[%c0_49, %c0_50] : memref<8x128xf32, #tpu.memory_space<vmem>>, vector<8x128xf32>
    tpu.vector_store %arg10[%c0_49, %c0_50], %163 {strides = array<i32>} : memref<8x128xf32, #tpu.memory_space<vmem>>, vector<8x128xf32>,
    return
  }
  func.func @transform_0(%arg0: i32) -> (i32, i32) {
    %c0_i32 = arith.constant 0 : i32
    %c0_i32_0 = arith.constant 0 : i32
    return %arg0, %c0_i32 : i32, i32
  }
  func.func @transform_1(%arg0: i32) -> (i32, i32) {
    %c0_i32 = arith.constant 0 : i32
    %c0_i32_0 = arith.constant 0 : i32
    %c0_i32_1 = arith.constant 0 : i32
    return %c0_i32, %c0_i32_0 : i32, i32
  }
  func.func @transform_2(%arg0: i32) -> (i32, i32) {
    %c0_i32 = arith.constant 0 : i32
    %c0_i32_0 = arith.constant 0 : i32
    %c0_i32_1 = arith.constant 0 : i32
    return %c0_i32, %c0_i32_0 : i32, i32
  }
  func.func @transform_3(%arg0: i32) -> (i32, i32) {
    %c0_i32 = arith.constant 0 : i32
    %c0_i32_0 = arith.constant 0 : i32
    %c0_i32_1 = arith.constant 0 : i32
    return %c0_i32, %c0_i32_0 : i32, i32
  }
  func.func @transform_4(%arg0: i32) -> (i32, i32) {
    %c0_i32 = arith.constant 0 : i32
    %c0_i32_0 = arith.constant 0 : i32
    %c0_i32_1 = arith.constant 0 : i32
    return %c0_i32, %c0_i32_0 : i32, i32
  }
  func.func @transform_5(%arg0: i32) -> (i32, i32) {
    %c0_i32 = arith.constant 0 : i32
    %c0_i32_0 = arith.constant 0 : i32
    %c0_i32_1 = arith.constant 0 : i32
    return %c0_i32, %c0_i32_0 : i32, i32
  }
  func.func @transform_6(%arg0: i32) -> (i32, i32) {
    %c0_i32 = arith.constant 0 : i32
    %c0_i32_0 = arith.constant 0 : i32
    %c0_i32_1 = arith.constant 0 : i32
    return %c0_i32, %c0_i32_0 : i32, i32
  }
  func.func @transform_7(%arg0: i32) -> (i32, i32) {
    %c0_i32 = arith.constant 0 : i32
    %c0_i32_0 = arith.constant 0 : i32
    %c0_i32_1 = arith.constant 0 : i32
    return %c0_i32, %c0_i32_0 : i32, i32
  }
  func.func @transform_8(%arg0: i32) -> (i32, i32) {
    %c0_i32 = arith.constant 0 : i32
    %c0_i32_0 = arith.constant 0 : i32
    return %arg0, %c0_i32 : i32, i32
  }
  func.func @transform_9(%arg0: i32) -> (i32, i32) {
    %c0_i32 = arith.constant 0 : i32
    %c0_i32_0 = arith.constant 0 : i32
    return %arg0, %c0_i32 : i32, i32
  }
}

</mosaic_0001>

<llo_original>
// kernel: autoencoder_forward.1
$region0: #{autoencoder_forward.1}
  #allocation0 [shape = 'u32[]', space=smem, size = 0x4, offset = 0x4, fixed_abs, tag = 'smem constant byte address 0x4 - core index']
  #allocation1 [shape = 'u32[144,128]{1,0:T(1,128)}', space=vmem, size = 0x12000, scoped, tag = 'internal scratch']
  %s0 = inlined_call_operand.vmem [shape: f32[16,128], index: 0, kind: input, shape index: {}]
  %s1 = inlined_call_operand.vmem [shape: f32[128,128], index: 1, kind: input, shape index: {}]
  %s2 = inlined_call_operand.vmem [shape: f32[128,128], index: 2, kind: input, shape index: {}]
  %s3 = inlined_call_operand.vmem [shape: f32[128,128], index: 3, kind: input, shape index: {}]
  %s4 = inlined_call_operand.vmem [shape: f32[128,128], index: 4, kind: input, shape index: {}]
  %s5 = inlined_call_operand.vmem [shape: f32[8,128], index: 5, kind: input, shape index: {}]
  %s6 = inlined_call_operand.vmem [shape: f32[8,128], index: 6, kind: input, shape index: {}]
  %s7 = inlined_call_operand.vmem [shape: f32[8,128], index: 7, kind: input, shape index: {}]
  %s8 = inlined_call_operand.vmem [shape: f32[16,128], index: 8, kind: output, shape index: {0}]
  %s9 = inlined_call_operand.vmem [shape: f32[16,128], index: 9, kind: output, shape index: {1}]
  %10 = xla_tuple %s8, %s9
  %s11 = sld [smem:[#allocation0]]
  $region73: #{autoencoder_forward.1} parent=0
    _
  %s13 = ssub.s32 1, %s11
  %s14 = scalar_select 0, %s13, %s11
  loop: start=0, step=1, limit=4
  $region2: #{autoencoder_forward.1} parent=0 // loop_pre_header
    _
  $region3: #{autoencoder_forward.1} parent=0 // loop_header
    %s16 = sphi 0, %s20
    %p17 = scmp.ge.s32.totalorder %s16, 4
    %s26 = sphi 0, %s28
    %s29 = sphi 0, %s26
    %s30 = sphi 0, %s29
    %s46 = sphi 0, %s30
    %s50 = sphi 0, %s50
    %s52 = sphi 0, %s50
    %s53 = sphi 0, %s52
    %s67 = sphi 0, %s53
    %s71 = sphi 0, %s71
    %s73 = sphi 0, %s71
    %s74 = sphi 0, %s73
    %s88 = sphi 0, %s74
    %s92 = sphi 0, %s92
    %s94 = sphi 0, %s92
    %s95 = sphi 0, %s94
    %s109 = sphi 0, %s95
    %s113 = sphi 0, %s113
    %s115 = sphi 0, %s113
    %s116 = sphi 0, %s115
    %s130 = sphi 0, %s116
    %s134 = sphi 0, %s134
    %s136 = sphi 0, %s134
    %s137 = sphi 0, %s136
    %s151 = sphi 0, %s137
    %s155 = sphi 0, %s155
    %s157 = sphi 0, %s155
    %s158 = sphi 0, %s157
    %s172 = sphi 0, %s158
    %s176 = sphi 0, %s176
    %s178 = sphi 0, %s176
    %s179 = sphi 0, %s178
    %s193 = sphi 0, %s179
    %s199 = sphi 0, %s201
    %s202 = sphi 0, %s199
    %s203 = sphi 0, %s202
    %s219 = sphi 0, %s203
    %s225 = sphi 0, %s227
    %s228 = sphi 0, %s225
    %s229 = sphi 0, %s228
    %s245 = sphi 0, %s229
  $region4: #{autoencoder_forward.1} parent=0 // loop_header_branch
    %19 = sbr.rel (%p17) target = $region8
  $region5: #{autoencoder_forward.1} parent=0 // loop_body
    %s21 = ssub.s32 %s16, 1
    %s22 = ssub.s32 %s16, 2
    %s23 = sadd.s32 %s16, 1
    %s24 = ssub.s32 %s16, %s23
    %p25 = scmp.eq.s32.totalorder %s24, 0
    %s27 = sadd.s32 %s26, 1
    %s28 = scalar_select %p25, %s26, %s27
    %p31 = pneg %p25
    %p32 = scmp.eq.s32.totalorder %s16, 1
    %p33 = por %p31, %p32
    %p34 = scmp.ne.s32.totalorder %s26, %s29
    %p35 = scmp.eq.s32.totalorder %s16, 0
    %p36 = por %p34, %p35
    %p37 = scmp.ne.s32.totalorder %s26, %s29
    %p38 = scmp.eq.s32.totalorder %s21, 1
    %p39 = por %p37, %p38
    %p40 = scmp.ne.s32.totalorder %s29, %s30
    %p41 = scmp.eq.s32.totalorder %s21, 0
    %p42 = por %p40, %p41
    %p43 = scmp.ne.s32.totalorder %s29, %s30
    %p44 = scmp.eq.s32.totalorder %s22, 1
    %p45 = por %p43, %p44
    %p47 = scmp.ne.s32.totalorder %s30, %s46
    %p48 = scmp.eq.s32.totalorder %s22, 0
    %p49 = por %p47, %p48
    %s51 = sadd.s32 %s50, 1
    %p54 = scmp.eq.s32.totalorder %s16, 1
    %p55 = scmp.ne.s32.totalorder %s50, %s52
    %p56 = scmp.eq.s32.totalorder %s16, 0
    %p57 = por %p55, %p56
    %p58 = scmp.ne.s32.totalorder %s50, %s52
    %p59 = scmp.eq.s32.totalorder %s21, 1
    %p60 = por %p58, %p59
    %p61 = scmp.ne.s32.totalorder %s52, %s53
    %p62 = scmp.eq.s32.totalorder %s21, 0
    %p63 = por %p61, %p62
    %p64 = scmp.ne.s32.totalorder %s52, %s53
    %p65 = scmp.eq.s32.totalorder %s22, 1
    %p66 = por %p64, %p65
    %p68 = scmp.ne.s32.totalorder %s53, %s67
    %p69 = scmp.eq.s32.totalorder %s22, 0
    %p70 = por %p68, %p69
    %s72 = sadd.s32 %s71, 1
    %p75 = scmp.eq.s32.totalorder %s16, 1
    %p76 = scmp.ne.s32.totalorder %s71, %s73
    %p77 = scmp.eq.s32.totalorder %s16, 0
    %p78 = por %p76, %p77
    %p79 = scmp.ne.s32.totalorder %s71, %s73
    %p80 = scmp.eq.s32.totalorder %s21, 1
    %p81 = por %p79, %p80
    %p82 = scmp.ne.s32.totalorder %s73, %s74
    %p83 = scmp.eq.s32.totalorder %s21, 0
    %p84 = por %p82, %p83
    %p85 = scmp.ne.s32.totalorder %s73, %s74
    %p86 = scmp.eq.s32.totalorder %s22, 1
    %p87 = por %p85, %p86
    %p89 = scmp.ne.s32.totalorder %s74, %s88
    %p90 = scmp.eq.s32.totalorder %s22, 0
    %p91 = por %p89, %p90
    %s93 = sadd.s32 %s92, 1
    %p96 = scmp.eq.s32.totalorder %s16, 1
    %p97 = scmp.ne.s32.totalorder %s92, %s94
    %p98 = scmp.eq.s32.totalorder %s16, 0
    %p99 = por %p97, %p98
    %p100 = scmp.ne.s32.totalorder %s92, %s94
    %p101 = scmp.eq.s32.totalorder %s21, 1
    %p102 = por %p100, %p101
    %p103 = scmp.ne.s32.totalorder %s94, %s95
    %p104 = scmp.eq.s32.totalorder %s21, 0
    %p105 = por %p103, %p104
    %p106 = scmp.ne.s32.totalorder %s94, %s95
    %p107 = scmp.eq.s32.totalorder %s22, 1
    %p108 = por %p106, %p107
    %p110 = scmp.ne.s32.totalorder %s95, %s109
    %p111 = scmp.eq.s32.totalorder %s22, 0
    %p112 = por %p110, %p111
    %s114 = sadd.s32 %s113, 1
    %p117 = scmp.eq.s32.totalorder %s16, 1
    %p118 = scmp.ne.s32.totalorder %s113, %s115
    %p119 = scmp.eq.s32.totalorder %s16, 0
    %p120 = por %p118, %p119
    %p121 = scmp.ne.s32.totalorder %s113, %s115
    %p122 = scmp.eq.s32.totalorder %s21, 1
    %p123 = por %p121, %p122
    %p124 = scmp.ne.s32.totalorder %s115, %s116
    %p125 = scmp.eq.s32.totalorder %s21, 0
    %p126 = por %p124, %p125
    %p127 = scmp.ne.s32.totalorder %s115, %s116
    %p128 = scmp.eq.s32.totalorder %s22, 1
    %p129 = por %p127, %p128
    %p131 = scmp.ne.s32.totalorder %s116, %s130
    %p132 = scmp.eq.s32.totalorder %s22, 0
    %p133 = por %p131, %p132
    %s135 = sadd.s32 %s134, 1
    %p138 = scmp.eq.s32.totalorder %s16, 1
    %p139 = scmp.ne.s32.totalorder %s134, %s136
    %p140 = scmp.eq.s32.totalorder %s16, 0
    %p141 = por %p139, %p140
    %p142 = scmp.ne.s32.totalorder %s134, %s136
    %p143 = scmp.eq.s32.totalorder %s21, 1
    %p144 = por %p142, %p143
    %p145 = scmp.ne.s32.totalorder %s136, %s137
    %p146 = scmp.eq.s32.totalorder %s21, 0
    %p147 = por %p145, %p146
    %p148 = scmp.ne.s32.totalorder %s136, %s137
    %p149 = scmp.eq.s32.totalorder %s22, 1
    %p150 = por %p148, %p149
    %p152 = scmp.ne.s32.totalorder %s137, %s151
    %p153 = scmp.eq.s32.totalorder %s22, 0
    %p154 = por %p152, %p153
    %s156 = sadd.s32 %s155, 1
    %p159 = scmp.eq.s32.totalorder %s16, 1
    %p160 = scmp.ne.s32.totalorder %s155, %s157
    %p161 = scmp.eq.s32.totalorder %s16, 0
    %p162 = por %p160, %p161
    %p163 = scmp.ne.s32.totalorder %s155, %s157
    %p164 = scmp.eq.s32.totalorder %s21, 1
    %p165 = por %p163, %p164
    %p166 = scmp.ne.s32.totalorder %s157, %s158
    %p167 = scmp.eq.s32.totalorder %s21, 0
    %p168 = por %p166, %p167
    %p169 = scmp.ne.s32.totalorder %s157, %s158
    %p170 = scmp.eq.s32.totalorder %s22, 1
    %p171 = por %p169, %p170
    %p173 = scmp.ne.s32.totalorder %s158, %s172
    %p174 = scmp.eq.s32.totalorder %s22, 0
    %p175 = por %p173, %p174
    %s177 = sadd.s32 %s176, 1
    %p180 = scmp.eq.s32.totalorder %s16, 1
    %p181 = scmp.ne.s32.totalorder %s176, %s178
    %p182 = scmp.eq.s32.totalorder %s16, 0
    %p183 = por %p181, %p182
    %p184 = scmp.ne.s32.totalorder %s176, %s178
    %p185 = scmp.eq.s32.totalorder %s21, 1
    %p186 = por %p184, %p185
    %p187 = scmp.ne.s32.totalorder %s178, %s179
    %p188 = scmp.eq.s32.totalorder %s21, 0
    %p189 = por %p187, %p188
    %p190 = scmp.ne.s32.totalorder %s178, %s179
    %p191 = scmp.eq.s32.totalorder %s22, 1
    %p192 = por %p190, %p191
    %p194 = scmp.ne.s32.totalorder %s179, %s193
    %p195 = scmp.eq.s32.totalorder %s22, 0
    %p196 = por %p194, %p195
    %s197 = ssub.s32 %s16, %s23
    %p198 = scmp.eq.s32.totalorder %s197, 0
    %s200 = sadd.s32 %s199, 1
    %s201 = scalar_select %p198, %s199, %s200
    %p204 = pneg %p198
    %p205 = scmp.eq.s32.totalorder %s16, 1
    %p206 = por %p204, %p205
    %p207 = scmp.ne.s32.totalorder %s199, %s202
    %p208 = scmp.eq.s32.totalorder %s16, 0
    %p209 = por %p207, %p208
    %p210 = scmp.ne.s32.totalorder %s199, %s202
    %p211 = scmp.eq.s32.totalorder %s21, 1
    %p212 = por %p210, %p211
    %p213 = scmp.ne.s32.totalorder %s202, %s203
    %p214 = scmp.eq.s32.totalorder %s21, 0
    %p215 = por %p213, %p214
    %p216 = scmp.ne.s32.totalorder %s202, %s203
    %p217 = scmp.eq.s32.totalorder %s22, 1
    %p218 = por %p216, %p217
    %p220 = scmp.ne.s32.totalorder %s203, %s219
    %p221 = scmp.eq.s32.totalorder %s22, 0
    %p222 = por %p220, %p221
    %s223 = ssub.s32 %s16, %s23
    %p224 = scmp.eq.s32.totalorder %s223, 0
    %s226 = sadd.s32 %s225, 1
    %s227 = scalar_select %p224, %s225, %s226
    %p230 = pneg %p224
    %p231 = scmp.eq.s32.totalorder %s16, 1
    %p232 = por %p230, %p231
    %p233 = scmp.ne.s32.totalorder %s225, %s228
    %p234 = scmp.eq.s32.totalorder %s16, 0
    %p235 = por %p233, %p234
    %p236 = scmp.ne.s32.totalorder %s225, %s228
    %p237 = scmp.eq.s32.totalorder %s21, 1
    %p238 = por %p236, %p237
    %p239 = scmp.ne.s32.totalorder %s228, %s229
    %p240 = scmp.eq.s32.totalorder %s21, 0
    %p241 = por %p239, %p240
    %p242 = scmp.ne.s32.totalorder %s228, %s229
    %p243 = scmp.eq.s32.totalorder %s22, 1
    %p244 = por %p242, %p243
    %p246 = scmp.ne.s32.totalorder %s229, %s245
    %p247 = scmp.eq.s32.totalorder %s22, 0
    %p248 = por %p246, %p247
    %p249 = scmp.le.s32.totalorder 1, %s16
    %p250 = scmp.lt.s32.totalorder %s16, 3
    %p251 = pnand %p249, %p250
    %p252 = pneg %p251
    // Predicated region
    $region9: #{autoencoder_forward.1} parent=5 // pred_check
      _
    $region10: #{autoencoder_forward.1} parent=5 // pred_check_branch
      %254 = sbr.rel (%p251) target = $region12
    $region11: #{autoencoder_forward.1} parent=5 // pred_region
      %s255 = ssub.s32 %s16, 1
      // Predicated region
      $region13: #{autoencoder_forward.1} parent=11 // pred_check
        %p256 = pneg %p63
      $region14: #{autoencoder_forward.1} parent=11 // pred_check_branch
        %258 = sbr.rel (%p256) target = $region16
      $region15: #{autoencoder_forward.1} parent=11 // pred_region
        _
      $region16: #{autoencoder_forward.1} parent=11 // pred_fallthru
        _
      // Predicated region
      $region17: #{autoencoder_forward.1} parent=11 // pred_check
        %p259 = pneg %p84
      $region18: #{autoencoder_forward.1} parent=11 // pred_check_branch
        %261 = sbr.rel (%p259) target = $region20
      $region19: #{autoencoder_forward.1} parent=11 // pred_region
        _
      $region20: #{autoencoder_forward.1} parent=11 // pred_fallthru
        _
      // Predicated region
      $region21: #{autoencoder_forward.1} parent=11 // pred_check
        %p262 = pneg %p105
      $region22: #{autoencoder_forward.1} parent=11 // pred_check_branch
        %264 = sbr.rel (%p262) target = $region24
      $region23: #{autoencoder_forward.1} parent=11 // pred_region
        _
      $region24: #{autoencoder_forward.1} parent=11 // pred_fallthru
        _
      // Predicated region
      $region25: #{autoencoder_forward.1} parent=11 // pred_check
        %p265 = pneg %p126
      $region26: #{autoencoder_forward.1} parent=11 // pred_check_branch
        %267 = sbr.rel (%p265) target = $region28
      $region27: #{autoencoder_forward.1} parent=11 // pred_region
        _
      $region28: #{autoencoder_forward.1} parent=11 // pred_fallthru
        _
      // Predicated region
      $region29: #{autoencoder_forward.1} parent=11 // pred_check
        %p268 = pneg %p147
      $region30: #{autoencoder_forward.1} parent=11 // pred_check_branch
        %270 = sbr.rel (%p268) target = $region32
      $region31: #{autoencoder_forward.1} parent=11 // pred_region
        _
      $region32: #{autoencoder_forward.1} parent=11 // pred_fallthru
        _
      // Predicated region
      $region33: #{autoencoder_forward.1} parent=11 // pred_check
        %p271 = pneg %p168
      $region34: #{autoencoder_forward.1} parent=11 // pred_check_branch
        %273 = sbr.rel (%p271) target = $region36
      $region35: #{autoencoder_forward.1} parent=11 // pred_region
        _
      $region36: #{autoencoder_forward.1} parent=11 // pred_fallthru
        _
      // Predicated region
      $region37: #{autoencoder_forward.1} parent=11 // pred_check
        %p274 = pneg %p189
      $region38: #{autoencoder_forward.1} parent=11 // pred_check_branch
        %276 = sbr.rel (%p274) target = $region40
      $region39: #{autoencoder_forward.1} parent=11 // pred_region
        _
      $region40: #{autoencoder_forward.1} parent=11 // pred_fallthru
        _
    $region12: #{autoencoder_forward.1} parent=5 // pred_fallthru
      _
    %p277 = scmp.lt.s32.totalorder %s16, 2
    // Predicated region
    $region41: #{autoencoder_forward.1} parent=5 // pred_check
      %p278 = pneg %p277
    $region42: #{autoencoder_forward.1} parent=5 // pred_check_branch
      %280 = sbr.rel (%p278) target = $region44
    $region43: #{autoencoder_forward.1} parent=5 // pred_region
      // Predicated region
      $region45: #{autoencoder_forward.1} parent=43 // pred_check
        %p281 = pneg %p36
      $region46: #{autoencoder_forward.1} parent=43 // pred_check_branch
        %283 = sbr.rel (%p281) target = $region48
      $region47: #{autoencoder_forward.1} parent=43 // pred_region
        %p284 = scmp.lt.s32.totalorder %s16, 1
        %s285 = scalar_select %p284, %s16, 1
        %s286 = smul.addr %s285, 8
        %s287 = scalar_lea.vmem %s0, %s286
      $region48: #{autoencoder_forward.1} parent=43 // pred_fallthru
        _
    $region44: #{autoencoder_forward.1} parent=5 // pred_fallthru
      _
    %p288 = scmp.le.s32.totalorder 1, %s16
    %p289 = scmp.lt.s32.totalorder %s16, 3
    %p290 = pnand %p288, %p289
    %p291 = pneg %p290
    // Predicated region
    $region49: #{autoencoder_forward.1} parent=5 // pred_check
      _
    $region50: #{autoencoder_forward.1} parent=5 // pred_check_branch
      %293 = sbr.rel (%p290) target = $region52
    $region51: #{autoencoder_forward.1} parent=5 // pred_region
      %s294 = ssub.s32 %s16, 1
      %p295 = scmp.lt.s32.totalorder %s21, 1
      %s296 = scalar_select %p295, %s21, 1
      %s297 = smul.addr %s296, 8
      %s298 = scalar_lea.vmem %s0, %s297
      %p299 = pneg %p42
      %p300 = pneg %p39
      %p301 = pneg %p63
      %p302 = pneg %p60
      %p303 = pneg %p84
      %p304 = pneg %p81
      %p305 = pneg %p105
      %p306 = pneg %p102
      %p307 = pneg %p126
      %p308 = pneg %p123
      %p309 = pneg %p147
      %p310 = pneg %p144
      %p311 = pneg %p168
      %p312 = pneg %p165
      %p313 = pneg %p189
      %p314 = pneg %p186
      %p315 = pneg %p215
      %p316 = pneg %p212
      %p317 = scmp.lt.s32.totalorder %s21, 1
      %s318 = scalar_select %p317, %s21, 1
      %s319 = smul.addr %s318, 8
      %s320 = scalar_lea.vmem %s8, %s319
      %p321 = pneg %p241
      %p322 = pneg %p238
      %p323 = scmp.lt.s32.totalorder %s21, 1
      %s324 = scalar_select %p323, %s21, 1
      %s325 = smul.addr %s324, 8
      %s326 = scalar_lea.vmem %s9, %s325
      %p327 = scmp.lt.s32.totalorder %s21, 1
      %s328 = scalar_select %p327, %s21, 1
      %s329 = smul.addr %s328, 8
      %s330 = scalar_lea.vmem %s0, %s329
      %p331 = scmp.lt.s32.totalorder %s21, 1
      %s332 = scalar_select %p331, %s21, 1
      %s333 = smul.addr %s332, 8
      %s334 = scalar_lea.vmem %s8, %s333
      %p335 = scmp.lt.s32.totalorder %s21, 1
      %s336 = scalar_select %p335, %s21, 1
      %s337 = smul.addr %s336, 8
      %s338 = scalar_lea.vmem %s9, %s337
      %v339 = vlaneseq
      %v340 = vand.u32 %v339, 127
      %vm341 = vcmp.lt.s32.totalorder %v340, 32
      %v342 = vsel %vm341, 1, 0
      %v343 = vcvt.s32.f32 %v342
      %vm344 = vcmp.lt.s32.totalorder %v340, 16
      %v345 = vsel %vm344, 1, 0
      %v346 = vcvt.s32.f32 %v345
      %v347 = vld [vmem:[%s5] sm:$0xff]
      %v348 = vld [vmem:[%s6] sm:$0xff]
      %v349 = vld [vmem:[%s7] sm:$0xff]
      %v350 = vld [vmem:[%s330] sm:$0xff]
      %v351 = vld [vmem:[%s1] sm:$0xff]
      %v352 = vld [vmem:[%s1 + $0x8] sm:$0xff]
      %v353 = vld [vmem:[%s1 + $0x10] sm:$0xff]
      %v354 = vld [vmem:[%s1 + $0x18] sm:$0xff]
      %v355 = vld [vmem:[%s1 + $0x20] sm:$0xff]
      %v356 = vld [vmem:[%s1 + $0x28] sm:$0xff]
      %v357 = vld [vmem:[%s1 + $0x30] sm:$0xff]
      %v358 = vld [vmem:[%s1 + $0x38] sm:$0xff]
      %v359 = vld [vmem:[%s1 + $0x40] sm:$0xff]
      %v360 = vld [vmem:[%s1 + $0x48] sm:$0xff]
      %v361 = vld [vmem:[%s1 + $0x50] sm:$0xff]
      %v362 = vld [vmem:[%s1 + $0x58] sm:$0xff]
      %v363 = vld [vmem:[%s1 + $0x60] sm:$0xff]
      %v364 = vld [vmem:[%s1 + $0x68] sm:$0xff]
      %v365 = vld [vmem:[%s1 + $0x70] sm:$0xff]
      %v366 = vld [vmem:[%s1 + $0x78] sm:$0xff]
      %v367 = vlaneseq
      %v368 = vshrl.u32 %v367, 7
      %v369 = vsub.s32 0, %v368
      %v370 = vrot.slane %v347, %v369
      %371 = vmatprep.subr.mxu0 0.0
      %372 = vmatpush1.msra.mxu0 %v351
      %373 = vmatprep.subr.mxu0 0.0
      %374 = vmatpush1.msra.mxu0 %v352
      %375 = vmatprep.subr.mxu0 0.0
      %376 = vmatpush1.msra.mxu0 %v353
      %377 = vmatprep.subr.mxu0 0.0
      %378 = vmatpush1.msra.mxu0 %v354
      %379 = vmatprep.subr.mxu0 0.0
      %380 = vmatpush1.msra.mxu0 %v355
      %381 = vmatprep.subr.mxu0 0.0
      %382 = vmatpush1.msra.mxu0 %v356
      %383 = vmatprep.subr.mxu0 0.0
      %384 = vmatpush1.msra.mxu0 %v357
      %385 = vmatprep.subr.mxu0 0.0
      %386 = vmatpush1.msra.mxu0 %v358
      %387 = vmatprep.subr.mxu0 0.0
      %388 = vmatpush1.msra.mxu0 %v359
      %389 = vmatprep.subr.mxu0 0.0
      %390 = vmatpush1.msra.mxu0 %v360
      %391 = vmatprep.subr.mxu0 0.0
      %392 = vmatpush1.msra.mxu0 %v361
      %393 = vmatprep.subr.mxu0 0.0
      %394 = vmatpush1.msra.mxu0 %v362
      %395 = vmatprep.subr.mxu0 0.0
      %396 = vmatpush1.msra.mxu0 %v363
      %397 = vmatprep.subr.mxu0 0.0
      %398 = vmatpush1.msra.mxu0 %v364
      %399 = vmatprep.subr.mxu0 0.0
      %400 = vmatpush1.msra.mxu0 %v365
      %401 = vmatprep.subr.mxu0 0.0
      %402 = vmatpush1.msra.mxu0 %v366
      %403 = vmatprep.subr.mxu0 0.0
      %404 = vmatpush1.msra.mxu0 0.0
      %405 = vmatprep.subr.mxu0 0.0
      %406 = vmatpush1.msra.mxu0 0.0
      %407 = vmatprep.subr.mxu0 0.0
      %408 = vmatpush1.msra.mxu0 0.0
      %409 = vmatprep.subr.mxu0 0.0
      %410 = vmatpush1.msra.mxu0 0.0
      %411 = vmatprep.subr.mxu0 0.0
      %412 = vmatpush1.msra.mxu0 0.0
      %413 = vmatprep.subr.mxu0 0.0
      %414 = vmatpush1.msra.mxu0 0.0
      %415 = vmatprep.subr.mxu0 0.0
      %416 = vmatpush1.msra.mxu0 0.0
      %417 = vmatprep.subr.mxu0 0.0
      %418 = vmatpush1.msra.mxu0 0.0
      %419 = vmatprep.subr.mxu0 0.0
      %420 = vmatpush1.msra.mxu0 0.0
      %421 = vmatprep.subr.mxu0 0.0
      %422 = vmatpush1.msra.mxu0 0.0
      %423 = vmatprep.subr.mxu0 0.0
      %424 = vmatpush1.msra.mxu0 0.0
      %425 = vmatprep.subr.mxu0 0.0
      %426 = vmatpush1.msra.mxu0 0.0
      %427 = vmatprep.subr.mxu0 0.0
      %428 = vmatpush1.msra.mxu0 0.0
      %429 = vmatprep.subr.mxu0 0.0
      %430 = vmatpush1.msra.mxu0 0.0
      %431 = vmatprep.subr.mxu0 0.0
      %432 = vmatpush1.msra.mxu0 0.0
      %433 = vmatprep.subr.mxu0 0.0
      %434 = vmatpush1.msra.mxu0 0.0
      %435 = vmatprep.mubr.f32.mxu0 0.0
      %436 = vmatmul.mubr.f32.gmra.mrb[0].mxu0 %v350
      %v437 = vpop.f32.mrb[0].mxu0
      %v438 = vadd.f32 %v370, %v437
      %v439 = vpop.f32.mrb[0].mxu0
      %440 = vdwg.mxu0
      %v441 = vmul.f32 %v438, %v343
      %442 = vadd.xlane.f32.xlu0 %v441
      %v443 = vpop.xlane.xlu0 %442
      %v444 = vmul.f32 %v443, 0.03125
      %v445 = vsub.f32 %v438, %v444
      %v446 = vmul.f32 %v445, %v343
      %v447 = vmul.f32 %v446, %v446
      %448 = vadd.xlane.f32.xlu0 %v447
      %v449 = vpop.xlane.xlu0 %448
      %v450 = vmul.f32 %v449, 0.03125
      %v451 = vadd.f32 %v450, 1e-05
      %v452 = vrsqrt.pop %v451
      %v453 = vmul.f32 %v446, %v452
      %v454 = vlaneseq
      %v455 = vshrl.u32 %v454, 7
      %v456 = vsub.s32 1, %v455
      %v457 = vrot.slane %v347, %v456
      %v458 = vmul.f32 %v453, %v457
      %v459 = vlaneseq
      %v460 = vshrl.u32 %v459, 7
      %v461 = vsub.s32 2, %v460
      %v462 = vrot.slane %v347, %v461
      %v463 = vadd.f32 %v458, %v462
      %v464 = vmul.f32 %v463, 0.5
      %v465 = vmul.f32 %v463, 0.70710677
      %v466 = verf.f32.pop %v465
      %v467 = vadd.f32 %v466, 1.0
      %v468 = vmul.f32 %v464, %v467
      %v469 = vld [vmem:[%s2] sm:$0xff]
      %v470 = vld [vmem:[%s2 + $0x8] sm:$0xff]
      %v471 = vld [vmem:[%s2 + $0x10] sm:$0xff]
      %v472 = vld [vmem:[%s2 + $0x18] sm:$0xff]
      %v473 = vld [vmem:[%s2 + $0x20] sm:$0xff]
      %v474 = vld [vmem:[%s2 + $0x28] sm:$0xff]
      %v475 = vld [vmem:[%s2 + $0x30] sm:$0xff]
      %v476 = vld [vmem:[%s2 + $0x38] sm:$0xff]
      %v477 = vld [vmem:[%s2 + $0x40] sm:$0xff]
      %v478 = vld [vmem:[%s2 + $0x48] sm:$0xff]
      %v479 = vld [vmem:[%s2 + $0x50] sm:$0xff]
      %v480 = vld [vmem:[%s2 + $0x58] sm:$0xff]
      %v481 = vld [vmem:[%s2 + $0x60] sm:$0xff]
      %v482 = vld [vmem:[%s2 + $0x68] sm:$0xff]
      %v483 = vld [vmem:[%s2 + $0x70] sm:$0xff]
      %v484 = vld [vmem:[%s2 + $0x78] sm:$0xff]
      %v485 = vlaneseq
      %v486 = vshrl.u32 %v485, 7
      %v487 = vsub.s32 0, %v486
      %v488 = vrot.slane %v348, %v487
      %489 = vmatprep.subr.mxu0 0.0
      %490 = vmatpush1.msra.mxu0 %v469
      %491 = vmatprep.subr.mxu0 0.0
      %492 = vmatpush1.msra.mxu0 %v470
      %493 = vmatprep.subr.mxu0 0.0
      %494 = vmatpush1.msra.mxu0 %v471
      %495 = vmatprep.subr.mxu0 0.0
      %496 = vmatpush1.msra.mxu0 %v472
      %497 = vmatprep.subr.mxu0 0.0
      %498 = vmatpush1.msra.mxu0 %v473
      %499 = vmatprep.subr.mxu0 0.0
      %500 = vmatpush1.msra.mxu0 %v474
      %501 = vmatprep.subr.mxu0 0.0
      %502 = vmatpush1.msra.mxu0 %v475
      %503 = vmatprep.subr.mxu0 0.0
      %504 = vmatpush1.msra.mxu0 %v476
      %505 = vmatprep.subr.mxu0 0.0
      %506 = vmatpush1.msra.mxu0 %v477
      %507 = vmatprep.subr.mxu0 0.0
      %508 = vmatpush1.msra.mxu0 %v478
      %509 = vmatprep.subr.mxu0 0.0
      %510 = vmatpush1.msra.mxu0 %v479
      %511 = vmatprep.subr.mxu0 0.0
      %512 = vmatpush1.msra.mxu0 %v480
      %513 = vmatprep.subr.mxu0 0.0
      %514 = vmatpush1.msra.mxu0 %v481
      %515 = vmatprep.subr.mxu0 0.0
      %516 = vmatpush1.msra.mxu0 %v482
      %517 = vmatprep.subr.mxu0 0.0
      %518 = vmatpush1.msra.mxu0 %v483
      %519 = vmatprep.subr.mxu0 0.0
      %520 = vmatpush1.msra.mxu0 %v484
      %521 = vmatprep.subr.mxu0 0.0
      %522 = vmatpush1.msra.mxu0 0.0
      %523 = vmatprep.subr.mxu0 0.0
      %524 = vmatpush1.msra.mxu0 0.0
      %525 = vmatprep.subr.mxu0 0.0
      %526 = vmatpush1.msra.mxu0 0.0
      %527 = vmatprep.subr.mxu0 0.0
      %528 = vmatpush1.msra.mxu0 0.0
      %529 = vmatprep.subr.mxu0 0.0
      %530 = vmatpush1.msra.mxu0 0.0
      %531 = vmatprep.subr.mxu0 0.0
      %532 = vmatpush1.msra.mxu0 0.0
      %533 = vmatprep.subr.mxu0 0.0
      %534 = vmatpush1.msra.mxu0 0.0
      %535 = vmatprep.subr.mxu0 0.0
      %536 = vmatpush1.msra.mxu0 0.0
      %537 = vmatprep.subr.mxu0 0.0
      %538 = vmatpush1.msra.mxu0 0.0
      %539 = vmatprep.subr.mxu0 0.0
      %540 = vmatpush1.msra.mxu0 0.0
      %541 = vmatprep.subr.mxu0 0.0
      %542 = vmatpush1.msra.mxu0 0.0
      %543 = vmatprep.subr.mxu0 0.0
      %544 = vmatpush1.msra.mxu0 0.0
      %545 = vmatprep.subr.mxu0 0.0
      %546 = vmatpush1.msra.mxu0 0.0
      %547 = vmatprep.subr.mxu0 0.0
      %548 = vmatpush1.msra.mxu0 0.0
      %549 = vmatprep.subr.mxu0 0.0
      %550 = vmatpush1.msra.mxu0 0.0
      %551 = vmatprep.subr.mxu0 0.0
      %552 = vmatpush1.msra.mxu0 0.0
      %553 = vmatprep.mubr.f32.mxu0 0.0
      %554 = vmatmul.mubr.f32.gmra.mrb[0].mxu0 %v468
      %v555 = vpop.f32.mrb[0].mxu0
      %v556 = vadd.f32 %v488, %v555
      %v557 = vpop.f32.mrb[0].mxu0
      %558 = vdwg.mxu0
      %v559 = vmul.f32 %v556, %v346
      %560 = vadd.xlane.f32.xlu0 %v559
      %v561 = vpop.xlane.xlu0 %560
      %v562 = vmul.f32 %v561, 0.0625
      %v563 = vsub.f32 %v556, %v562
      %v564 = vmul.f32 %v563, %v346
      %v565 = vmul.f32 %v564, %v564
      %566 = vadd.xlane.f32.xlu0 %v565
      %v567 = vpop.xlane.xlu0 %566
      %v568 = vmul.f32 %v567, 0.0625
      %v569 = vadd.f32 %v568, 1e-05
      %v570 = vrsqrt.pop %v569
      %v571 = vmul.f32 %v564, %v570
      %v572 = vlaneseq
      %v573 = vshrl.u32 %v572, 7
      %v574 = vsub.s32 1, %v573
      %v575 = vrot.slane %v348, %v574
      %v576 = vmul.f32 %v571, %v575
      %v577 = vlaneseq
      %v578 = vshrl.u32 %v577, 7
      %v579 = vsub.s32 2, %v578
      %v580 = vrot.slane %v348, %v579
      %v581 = vadd.f32 %v576, %v580
      %582 = vst [vmem:[%s334] sm:$0xff] %v581
      %v583 = vld [vmem:[%s3] sm:$0xff]
      %v584 = vld [vmem:[%s3 + $0x8] sm:$0xff]
      %v585 = vld [vmem:[%s3 + $0x10] sm:$0xff]
      %v586 = vld [vmem:[%s3 + $0x18] sm:$0xff]
      %v587 = vld [vmem:[%s3 + $0x20] sm:$0xff]
      %v588 = vld [vmem:[%s3 + $0x28] sm:$0xff]
      %v589 = vld [vmem:[%s3 + $0x30] sm:$0xff]
      %v590 = vld [vmem:[%s3 + $0x38] sm:$0xff]
      %v591 = vld [vmem:[%s3 + $0x40] sm:$0xff]
      %v592 = vld [vmem:[%s3 + $0x48] sm:$0xff]
      %v593 = vld [vmem:[%s3 + $0x50] sm:$0xff]
      %v594 = vld [vmem:[%s3 + $0x58] sm:$0xff]
      %v595 = vld [vmem:[%s3 + $0x60] sm:$0xff]
      %v596 = vld [vmem:[%s3 + $0x68] sm:$0xff]
      %v597 = vld [vmem:[%s3 + $0x70] sm:$0xff]
      %v598 = vld [vmem:[%s3 + $0x78] sm:$0xff]
      %v599 = vlaneseq
      %v600 = vshrl.u32 %v599, 7
      %v601 = vsub.s32 3, %v600
      %v602 = vrot.slane %v347, %v601
      %603 = vmatprep.subr.mxu0 0.0
      %604 = vmatpush1.msra.mxu0 %v583
      %605 = vmatprep.subr.mxu0 0.0
      %606 = vmatpush1.msra.mxu0 %v584
      %607 = vmatprep.subr.mxu0 0.0
      %608 = vmatpush1.msra.mxu0 %v585
      %609 = vmatprep.subr.mxu0 0.0
      %610 = vmatpush1.msra.mxu0 %v586
      %611 = vmatprep.subr.mxu0 0.0
      %612 = vmatpush1.msra.mxu0 %v587
      %613 = vmatprep.subr.mxu0 0.0
      %614 = vmatpush1.msra.mxu0 %v588
      %615 = vmatprep.subr.mxu0 0.0
      %616 = vmatpush1.msra.mxu0 %v589
      %617 = vmatprep.subr.mxu0 0.0
      %618 = vmatpush1.msra.mxu0 %v590
      %619 = vmatprep.subr.mxu0 0.0
      %620 = vmatpush1.msra.mxu0 %v591
      %621 = vmatprep.subr.mxu0 0.0
      %622 = vmatpush1.msra.mxu0 %v592
      %623 = vmatprep.subr.mxu0 0.0
      %624 = vmatpush1.msra.mxu0 %v593
      %625 = vmatprep.subr.mxu0 0.0
      %626 = vmatpush1.msra.mxu0 %v594
      %627 = vmatprep.subr.mxu0 0.0
      %628 = vmatpush1.msra.mxu0 %v595
      %629 = vmatprep.subr.mxu0 0.0
      %630 = vmatpush1.msra.mxu0 %v596
      %631 = vmatprep.subr.mxu0 0.0
      %632 = vmatpush1.msra.mxu0 %v597
      %633 = vmatprep.subr.mxu0 0.0
      %634 = vmatpush1.msra.mxu0 %v598
      %635 = vmatprep.subr.mxu0 0.0
      %636 = vmatpush1.msra.mxu0 0.0
      %637 = vmatprep.subr.mxu0 0.0
      %638 = vmatpush1.msra.mxu0 0.0
      %639 = vmatprep.subr.mxu0 0.0
      %640 = vmatpush1.msra.mxu0 0.0
      %641 = vmatprep.subr.mxu0 0.0
      %642 = vmatpush1.msra.mxu0 0.0
      %643 = vmatprep.subr.mxu0 0.0
      %644 = vmatpush1.msra.mxu0 0.0
      %645 = vmatprep.subr.mxu0 0.0
      %646 = vmatpush1.msra.mxu0 0.0
      %647 = vmatprep.subr.mxu0 0.0
      %648 = vmatpush1.msra.mxu0 0.0
      %649 = vmatprep.subr.mxu0 0.0
      %650 = vmatpush1.msra.mxu0 0.0
      %651 = vmatprep.subr.mxu0 0.0
      %652 = vmatpush1.msra.mxu0 0.0
      %653 = vmatprep.subr.mxu0 0.0
      %654 = vmatpush1.msra.mxu0 0.0
      %655 = vmatprep.subr.mxu0 0.0
      %656 = vmatpush1.msra.mxu0 0.0
      %657 = vmatprep.subr.mxu0 0.0
      %658 = vmatpush1.msra.mxu0 0.0
      %659 = vmatprep.subr.mxu0 0.0
      %660 = vmatpush1.msra.mxu0 0.0
      %661 = vmatprep.subr.mxu0 0.0
      %662 = vmatpush1.msra.mxu0 0.0
      %663 = vmatprep.subr.mxu0 0.0
      %664 = vmatpush1.msra.mxu0 0.0
      %665 = vmatprep.subr.mxu0 0.0
      %666 = vmatpush1.msra.mxu0 0.0
      %667 = vmatprep.mubr.f32.mxu0 0.0
      %668 = vmatmul.mubr.f32.gmra.mrb[0].mxu0 %v581
      %v669 = vpop.f32.mrb[0].mxu0
      %v670 = vadd.f32 %v602, %v669
      %v671 = vpop.f32.mrb[0].mxu0
      %672 = vdwg.mxu0
      %v673 = vmul.f32 %v670, %v343
      %674 = vadd.xlane.f32.xlu0 %v673
      %v675 = vpop.xlane.xlu0 %674
      %v676 = vmul.f32 %v675, 0.03125
      %v677 = vsub.f32 %v670, %v676
      %v678 = vmul.f32 %v677, %v343
      %v679 = vmul.f32 %v678, %v678
      %680 = vadd.xlane.f32.xlu0 %v679
      %v681 = vpop.xlane.xlu0 %680
      %v682 = vmul.f32 %v681, 0.03125
      %v683 = vadd.f32 %v682, 1e-05
      %v684 = vrsqrt.pop %v683
      %v685 = vmul.f32 %v678, %v684
      %v686 = vlaneseq
      %v687 = vshrl.u32 %v686, 7
      %v688 = vsub.s32 4, %v687
      %v689 = vrot.slane %v347, %v688
      %v690 = vmul.f32 %v685, %v689
      %v691 = vlaneseq
      %v692 = vshrl.u32 %v691, 7
      %v693 = vsub.s32 5, %v692
      %v694 = vrot.slane %v347, %v693
      %v695 = vadd.f32 %v690, %v694
      %v696 = vmul.f32 %v695, 0.5
      %v697 = vmul.f32 %v695, 0.70710677
      %v698 = verf.f32.pop %v697
      %v699 = vadd.f32 %v698, 1.0
      %v700 = vmul.f32 %v696, %v699
      %v701 = vld [vmem:[%s4] sm:$0xff]
      %v702 = vld [vmem:[%s4 + $0x8] sm:$0xff]
      %v703 = vld [vmem:[%s4 + $0x10] sm:$0xff]
      %v704 = vld [vmem:[%s4 + $0x18] sm:$0xff]
      %v705 = vld [vmem:[%s4 + $0x20] sm:$0xff]
      %v706 = vld [vmem:[%s4 + $0x28] sm:$0xff]
      %v707 = vld [vmem:[%s4 + $0x30] sm:$0xff]
      %v708 = vld [vmem:[%s4 + $0x38] sm:$0xff]
      %v709 = vld [vmem:[%s4 + $0x40] sm:$0xff]
      %v710 = vld [vmem:[%s4 + $0x48] sm:$0xff]
      %v711 = vld [vmem:[%s4 + $0x50] sm:$0xff]
      %v712 = vld [vmem:[%s4 + $0x58] sm:$0xff]
      %v713 = vld [vmem:[%s4 + $0x60] sm:$0xff]
      %v714 = vld [vmem:[%s4 + $0x68] sm:$0xff]
      %v715 = vld [vmem:[%s4 + $0x70] sm:$0xff]
      %v716 = vld [vmem:[%s4 + $0x78] sm:$0xff]
      %v717 = vlaneseq
      %v718 = vshrl.u32 %v717, 7
      %v719 = vsub.s32 0, %v718
      %v720 = vrot.slane %v349, %v719
      %721 = vmatprep.subr.mxu0 0.0
      %722 = vmatpush1.msra.mxu0 %v701
      %723 = vmatprep.subr.mxu0 0.0
      %724 = vmatpush1.msra.mxu0 %v702
      %725 = vmatprep.subr.mxu0 0.0
      %726 = vmatpush1.msra.mxu0 %v703
      %727 = vmatprep.subr.mxu0 0.0
      %728 = vmatpush1.msra.mxu0 %v704
      %729 = vmatprep.subr.mxu0 0.0
      %730 = vmatpush1.msra.mxu0 %v705
      %731 = vmatprep.subr.mxu0 0.0
      %732 = vmatpush1.msra.mxu0 %v706
      %733 = vmatprep.subr.mxu0 0.0
      %734 = vmatpush1.msra.mxu0 %v707
      %735 = vmatprep.subr.mxu0 0.0
      %736 = vmatpush1.msra.mxu0 %v708
      %737 = vmatprep.subr.mxu0 0.0
      %738 = vmatpush1.msra.mxu0 %v709
      %739 = vmatprep.subr.mxu0 0.0
      %740 = vmatpush1.msra.mxu0 %v710
      %741 = vmatprep.subr.mxu0 0.0
      %742 = vmatpush1.msra.mxu0 %v711
      %743 = vmatprep.subr.mxu0 0.0
      %744 = vmatpush1.msra.mxu0 %v712
      %745 = vmatprep.subr.mxu0 0.0
      %746 = vmatpush1.msra.mxu0 %v713
      %747 = vmatprep.subr.mxu0 0.0
      %748 = vmatpush1.msra.mxu0 %v714
      %749 = vmatprep.subr.mxu0 0.0
      %750 = vmatpush1.msra.mxu0 %v715
      %751 = vmatprep.subr.mxu0 0.0
      %752 = vmatpush1.msra.mxu0 %v716
      %753 = vmatprep.subr.mxu0 0.0
      %754 = vmatpush1.msra.mxu0 0.0
      %755 = vmatprep.subr.mxu0 0.0
      %756 = vmatpush1.msra.mxu0 0.0
      %757 = vmatprep.subr.mxu0 0.0
      %758 = vmatpush1.msra.mxu0 0.0
      %759 = vmatprep.subr.mxu0 0.0
      %760 = vmatpush1.msra.mxu0 0.0
      %761 = vmatprep.subr.mxu0 0.0
      %762 = vmatpush1.msra.mxu0 0.0
      %763 = vmatprep.subr.mxu0 0.0
      %764 = vmatpush1.msra.mxu0 0.0
      %765 = vmatprep.subr.mxu0 0.0
      %766 = vmatpush1.msra.mxu0 0.0
      %767 = vmatprep.subr.mxu0 0.0
      %768 = vmatpush1.msra.mxu0 0.0
      %769 = vmatprep.subr.mxu0 0.0
      %770 = vmatpush1.msra.mxu0 0.0
      %771 = vmatprep.subr.mxu0 0.0
      %772 = vmatpush1.msra.mxu0 0.0
      %773 = vmatprep.subr.mxu0 0.0
      %774 = vmatpush1.msra.mxu0 0.0
      %775 = vmatprep.subr.mxu0 0.0
      %776 = vmatpush1.msra.mxu0 0.0
      %777 = vmatprep.subr.mxu0 0.0
      %778 = vmatpush1.msra.mxu0 0.0
      %779 = vmatprep.subr.mxu0 0.0
      %780 = vmatpush1.msra.mxu0 0.0
      %781 = vmatprep.subr.mxu0 0.0
      %782 = vmatpush1.msra.mxu0 0.0
      %783 = vmatprep.subr.mxu0 0.0
      %784 = vmatpush1.msra.mxu0 0.0
      %785 = vmatprep.mubr.f32.mxu0 0.0
      %786 = vmatmul.mubr.f32.gmra.mrb[0].mxu0 %v700
      %v787 = vpop.f32.mrb[0].mxu0
      %v788 = vadd.f32 %v720, %v787
      %v789 = vpop.f32.mrb[0].mxu0
      %790 = vdwg.mxu0
      %v791 = vmul.f32 %v788, %v343
      %792 = vadd.xlane.f32.xlu0 %v791
      %v793 = vpop.xlane.xlu0 %792
      %v794 = vmul.f32 %v793, 0.03125
      %v795 = vsub.f32 %v788, %v794
      %v796 = vmul.f32 %v795, %v343
      %v797 = vmul.f32 %v796, %v796
      %798 = vadd.xlane.f32.xlu0 %v797
      %v799 = vpop.xlane.xlu0 %798
      %v800 = vmul.f32 %v799, 0.03125
      %v801 = vadd.f32 %v800, 1e-05
      %v802 = vrsqrt.pop %v801
      %v803 = vmul.f32 %v796, %v802
      %v804 = vlaneseq
      %v805 = vshrl.u32 %v804, 7
      %v806 = vsub.s32 1, %v805
      %v807 = vrot.slane %v349, %v806
      %v808 = vmul.f32 %v803, %v807
      %v809 = vlaneseq
      %v810 = vshrl.u32 %v809, 7
      %v811 = vsub.s32 2, %v810
      %v812 = vrot.slane %v349, %v811
      %v813 = vadd.f32 %v808, %v812
      %814 = vst [vmem:[%s338] sm:$0xff] %v813
      %p815 = scmp.lt.s32.totalorder %s21, 1
      %s816 = scalar_select %p815, %s21, 1
      %s817 = smul.addr %s816, 8
      %s818 = scalar_lea.vmem %s8, %s817
      %p819 = scmp.lt.s32.totalorder %s21, 1
      %s820 = scalar_select %p819, %s21, 1
      %s821 = smul.addr %s820, 8
      %s822 = scalar_lea.vmem %s9, %s821
      // Predicated region
      $region53: #{autoencoder_forward.1} parent=51 // pred_check
        %p823 = pneg %p212
      $region54: #{autoencoder_forward.1} parent=51 // pred_check_branch
        %825 = sbr.rel (%p823) target = $region56
      $region55: #{autoencoder_forward.1} parent=51 // pred_region
        _
      $region56: #{autoencoder_forward.1} parent=51 // pred_fallthru
        _
      // Predicated region
      $region57: #{autoencoder_forward.1} parent=51 // pred_check
        %p826 = pneg %p238
      $region58: #{autoencoder_forward.1} parent=51 // pred_check_branch
        %828 = sbr.rel (%p826) target = $region60
      $region59: #{autoencoder_forward.1} parent=51 // pred_region
        _
      $region60: #{autoencoder_forward.1} parent=51 // pred_fallthru
        _
    $region52: #{autoencoder_forward.1} parent=5 // pred_fallthru
      _
    %p829 = scmp.le.s32.totalorder 2, %s16
    // Predicated region
    $region61: #{autoencoder_forward.1} parent=5 // pred_check
      %p830 = pneg %p829
    $region62: #{autoencoder_forward.1} parent=5 // pred_check_branch
      %832 = sbr.rel (%p830) target = $region64
    $region63: #{autoencoder_forward.1} parent=5 // pred_region
      %s833 = ssub.s32 %s16, 2
      // Predicated region
      $region65: #{autoencoder_forward.1} parent=63 // pred_check
        %p834 = pneg %p218
      $region66: #{autoencoder_forward.1} parent=63 // pred_check_branch
        %836 = sbr.rel (%p834) target = $region68
      $region67: #{autoencoder_forward.1} parent=63 // pred_region
        %p837 = scmp.lt.s32.totalorder %s22, 1
        %s838 = scalar_select %p837, %s22, 1
        %s839 = smul.addr %s838, 8
        %s840 = scalar_lea.vmem %s8, %s839
      $region68: #{autoencoder_forward.1} parent=63 // pred_fallthru
        _
      // Predicated region
      $region69: #{autoencoder_forward.1} parent=63 // pred_check
        %p841 = pneg %p244
      $region70: #{autoencoder_forward.1} parent=63 // pred_check_branch
        %843 = sbr.rel (%p841) target = $region72
      $region71: #{autoencoder_forward.1} parent=63 // pred_region
        %p844 = scmp.lt.s32.totalorder %s22, 1
        %s845 = scalar_select %p844, %s22, 1
        %s846 = smul.addr %s845, 8
        %s847 = scalar_lea.vmem %s9, %s846
      $region72: #{autoencoder_forward.1} parent=63 // pred_fallthru
        _
    $region64: #{autoencoder_forward.1} parent=5 // pred_fallthru
      _
  $region6: #{autoencoder_forward.1} parent=0 // loop_footer
    %s20 = sadd.s32 1, %s16
  $region7: #{autoencoder_forward.1} parent=0 // loop_footer_branch
    %15 = sbr.rel target = $region3
  $region8: #{autoencoder_forward.1} parent=0 // loop_exit
    _

</llo_original>
